<compile_context>
chip_gen: v6e
topology: v6e:2x2x1
jax: 0.10.0
libtpu: 0.0.40
codegen_flags: <defaults>
</compile_context>

<pallas_src>
import functools

import jax
import jax.numpy as jnp
from jax.experimental import pallas as pl
from jax.experimental.pallas import tpu as pltpu

_VMEM_LIMIT_BYTES = 48 * 1024 * 1024  # explicit scoped-VMEM limit, < 64 MiB v7x physical


# ---------------------------------------------------------------------------
# Kernels
# ---------------------------------------------------------------------------
def cheb_prop_kernel(*refs, scale, subtract):
    """One Chebyshev propagation hop: out = scale * (L @ T_prev) [- T_prev2].

    Grid = (row_tiles, col_tiles); axis 1 is the reduction over L's columns.
    refs (subtract=True):  l_ref(bm,bk), t_ref(bk,F), tm2_ref(bm,F), o_ref(bm,F), acc(bm,F)
    refs (subtract=False): l_ref(bm,bk), t_ref(bk,F),                o_ref(bm,F), acc(bm,F)
    """
    if subtract:
        l_ref, t_ref, tm2_ref, o_ref, acc_ref = refs
    else:
        l_ref, t_ref, o_ref, acc_ref = refs
        tm2_ref = None

    k = pl.program_id(1)

    @pl.when(k == 0)
    def _init():
        acc_ref[...] = jnp.zeros_like(acc_ref)

    acc_ref[...] += jnp.dot(l_ref[...], t_ref[...],
                            preferred_element_type=jnp.float32)

    @pl.when(k == pl.num_programs(1) - 1)
    def _finalize():
        res = acc_ref[...]
        if scale != 1.0:
            res = res * jnp.float32(scale)
        if subtract:
            res = res - tm2_ref[...].astype(jnp.float32)  # keep recursion subtraction in f32
        o_ref[...] = res.astype(o_ref.dtype)


def cheb_dense_kernel(*refs, num_hops, apply_relu, apply_log_softmax, valid_cols):
    """Fused per-layer epilogue: concat(T_0..T_{K-1}) @ W_stack + b [+ relu | log_softmax].

    refs: T_0..T_{K-1} each (bm, F_pad), W_stack (K*F_pad, Fout_pad),
          bias (1, Fout_pad) f32, o_ref (bm, Fout_pad)
    """
    t_refs = refs[:num_hops]
    w_ref = refs[num_hops]
    b_ref = refs[num_hops + 1]
    o_ref = refs[num_hops + 2]

    # One lane-dense MXU matmul instead of K skinny ones.
    t_cat = jnp.concatenate([t_refs[h][...] for h in range(num_hops)], axis=-1)
    acc = jnp.dot(t_cat, w_ref[...], preferred_element_type=jnp.float32)
    acc = acc + b_ref[...].astype(jnp.float32)

    if apply_relu:
        acc = jnp.maximum(acc, 0.0)

    if apply_log_softmax:
        col = jax.lax.broadcasted_iota(jnp.int32, acc.shape, dimension=1)
        valid = col < valid_cols
        masked = jnp.where(valid, acc, -1e30)  # mask padded class lanes
        m = jnp.max(masked, axis=-1, keepdims=True)
        z = masked - m
        lse = jnp.log(jnp.sum(jnp.exp(z), axis=-1, keepdims=True))
        acc = jnp.where(valid, z - lse, 0.0)

    o_ref[...] = acc.astype(o_ref.dtype)


# ---------------------------------------------------------------------------
# Wrappers
# ---------------------------------------------------------------------------
def _round_up(x, m):
    return (x + m - 1) // m * m


def _pick_block(n_pad, target):
    """Largest multiple of 128 that divides n_pad and is <= target."""
    b = max(128, (min(target, n_pad) // 128) * 128)
    while n_pad % b:
        b -= 128
    return b


def _pad2(a, rows, cols):
    return jnp.pad(a, ((0, rows - a.shape[0]), (0, cols - a.shape[1])))


def _stack_weights(w, f_in_pad, f_out_pad, dtype):
    """(K, f_in, f_out) -> zero-padded (K * f_in_pad, f_out_pad)."""
    k, f_in, f_out = w.shape
    ws = jnp.zeros((k, f_in_pad, f_out_pad), dtype)
    ws = ws.at[:, :f_in, :f_out].set(w.astype(dtype))
    return ws.reshape(k * f_in_pad, f_out_pad)


def _cheb_prop(l_pad, t_prev, t_prev2, *, scale, subtract, block_m, block_k):
    n_pad = l_pad.shape[0]
    f_pad = t_prev.shape[1]
    dtype = t_prev.dtype
    grid = (n_pad // block_m, n_pad // block_k)

    kernel = functools.partial(cheb_prop_kernel, scale=scale, subtract=subtract)

    in_specs = [
        pl.BlockSpec((block_m, block_k), lambda i, k: (i, k)),   # L tile
        pl.BlockSpec((block_k, f_pad), lambda i, k: (k, 0)),     # T_{k-1} tile
    ]
    args = [l_pad, t_prev]
    if subtract:
        in_specs.append(pl.BlockSpec((block_m, f_pad), lambda i, k: (i, 0)))  # T_{k-2}
        args.append(t_prev2)

    itemsize = jnp.dtype(dtype).itemsize
    cost = pl.CostEstimate(
        flops=2 * n_pad * n_pad * f_pad,
        transcendentals=0,
        bytes_accessed=(n_pad * n_pad * itemsize
                        + grid[0] * n_pad * f_pad * itemsize
                        + (2 if subtract else 1) * n_pad * f_pad * itemsize),
    )

    return pl.pallas_call(
        kernel,
        out_shape=jax.ShapeDtypeStruct((n_pad, f_pad), dtype),
        grid=grid,
        in_specs=in_specs,
        out_specs=pl.BlockSpec((block_m, f_pad), lambda i, k: (i, 0)),
        scratch_shapes=[pltpu.VMEM((block_m, f_pad), jnp.float32)],
        compiler_params=pltpu.CompilerParams(
            dimension_semantics=("parallel", "arbitrary"),
            vmem_limit_bytes=_VMEM_LIMIT_BYTES,
        ),
        cost_estimate=cost,
    )(*args)


def _cheb_basis(l_pad, t0, num_hops, block_m, block_k):
    """Return [T_0, T_1, ..., T_{K-1}] with T_0 = t0."""
    ts = [t0]
    if num_hops > 1:
        ts.append(_cheb_prop(l_pad, ts[-1], None, scale=1.0, subtract=False,
                             block_m=block_m, block_k=block_k))
    for _ in range(2, num_hops):
        ts.append(_cheb_prop(l_pad, ts[-1], ts[-2], scale=2.0, subtract=True,
                             block_m=block_m, block_k=block_k))
    return ts


def _cheb_dense(t_list, w_stack, bias, *, apply_relu, apply_log_softmax,
                valid_cols, block_m, out_dtype):
    n_pad, f_pad = t_list[0].shape
    kf, fout_pad = w_stack.shape
    num_hops = len(t_list)
    grid = (n_pad // block_m,)

    kernel = functools.partial(cheb_dense_kernel, num_hops=num_hops,
                               apply_relu=apply_relu,
                               apply_log_softmax=apply_log_softmax,
                               valid_cols=valid_cols)

    in_specs = [pl.BlockSpec((block_m, f_pad), lambda i: (i, 0)) for _ in t_list]
    in_specs += [
        pl.BlockSpec((kf, fout_pad), lambda i: (0, 0)),   # stacked weights (resident)
        pl.BlockSpec((1, fout_pad), lambda i: (0, 0)),    # bias (f32)
    ]

    itemsize = jnp.dtype(t_list[0].dtype).itemsize
    cost = pl.CostEstimate(
        flops=2 * n_pad * kf * fout_pad,
        transcendentals=(n_pad * fout_pad if apply_log_softmax else 0),
        bytes_accessed=(num_hops * n_pad * f_pad * itemsize
                        + kf * fout_pad * itemsize
                        + fout_pad * 4
                        + n_pad * fout_pad * jnp.dtype(out_dtype).itemsize),
    )

    return pl.pallas_call(
        kernel,
        out_shape=jax.ShapeDtypeStruct((n_pad, fout_pad), out_dtype),
        grid=grid,
        in_specs=in_specs,
        out_specs=pl.BlockSpec((block_m, fout_pad), lambda i: (i, 0)),
        compiler_params=pltpu.CompilerParams(
            dimension_semantics=("parallel",),
            vmem_limit_bytes=_VMEM_LIMIT_BYTES,
        ),
        cost_estimate=cost,
    )(*t_list, w_stack, bias)


def chebnet_forward(l_hat, x, w1, b1, w2, b2, *, num_hops,
                    compute_dtype=jnp.bfloat16,
                    block_m_target=512, block_k_target=1024):
    """Full ChebNet forward (eval mode). Returns (N, num_classes) f32 log-probs."""
    n, f_in = x.shape
    hidden = w1.shape[-1]
    n_classes = w2.shape[-1]
    assert w1.shape[0] == num_hops and w2.shape[0] == num_hops

    # Lane-dense padding: nodes to a 128 multiple (sublane/lane tiles), features to 128.
    n_pad = _round_up(n, 128)
    block_m = _pick_block(n_pad, block_m_target)
    block_k = _pick_block(n_pad, block_k_target)
    f_in_pad = _round_up(f_in, 128)
    hid_pad = _round_up(hidden, 128)
    cls_pad = _round_up(n_classes, 128)

    l_pad = _pad2(l_hat.astype(compute_dtype), n_pad, n_pad)
    x_pad = _pad2(x.astype(compute_dtype), n_pad, f_in_pad)
    w1_s = _stack_weights(w1, f_in_pad, hid_pad, compute_dtype)
    b1_p = _pad2(b1.reshape(1, -1).astype(jnp.float32), 1, hid_pad)
    w2_s = _stack_weights(w2, hid_pad, cls_pad, compute_dtype)
    b2_p = _pad2(b2.reshape(1, -1).astype(jnp.float32), 1, cls_pad)

    # Layer 1: Chebyshev basis passes, then fused weight-matmul + bias + relu.
    t1 = _cheb_basis(l_pad, x_pad, num_hops, block_m, block_k)
    h = _cheb_dense(t1, w1_s, b1_p, apply_relu=True, apply_log_softmax=False,
                    valid_cols=hidden, block_m=block_m, out_dtype=compute_dtype)
    # (dropout = identity in eval mode)

    # Layer 2: same, epilogue is bias + masked log_softmax, f32 output.
    t2 = _cheb_basis(l_pad, h, num_hops, block_m, block_k)
    out_pad = _cheb_dense(t2, w2_s, b2_p, apply_relu=False, apply_log_softmax=True,
                          valid_cols=n_classes, block_m=block_m, out_dtype=jnp.float32)

    return out_pad[:n, :n_classes]


# ---------------------------------------------------------------------------
# Reference, graph construction, init
# ---------------------------------------------------------------------------
def chebnet_reference(l_hat, x, w1, b1, w2, b2, *, num_hops):
    def conv(feat, w, b):
        ts = [feat]
        if num_hops > 1:
            ts.append(l_hat @ feat)
        for _ in range(2, num_hops):
            ts.append(2.0 * (l_hat @ ts[-1]) - ts[-2])
        return sum(t @ w[i] for i, t in enumerate(ts)) + b.reshape(1, -1)

    h = jnp.maximum(conv(x, w1, b1), 0.0)
    logits = conv(h, w2, b2)
    return jax.nn.log_softmax(logits, axis=1)


def build_scaled_laplacian(edge_index, num_nodes):
    """L_hat = 2L/lambda_max - I = -D^{-1/2} A D^{-1/2}  (sym norm, lambda_max=2)."""
    row, col = edge_index
    adj = jnp.zeros((num_nodes, num_nodes), jnp.float32).at[row, col].set(1.0)
    deg = adj.sum(axis=1)
    d_inv_sqrt = jnp.where(deg > 0, 1.0 / jnp.sqrt(jnp.maximum(deg, 1e-12)), 0.0)
    return -(d_inv_sqrt[:, None] * adj * d_inv_sqrt[None, :])


def glorot(key, shape):
    fan_in, fan_out = shape[-2], shape[-1]
    limit = jnp.sqrt(6.0 / (fan_in + fan_out))
    return jax.random.uniform(key, shape, jnp.float32, -limit, limit)


if __name__ == "__main__":
    # Small config consistent with ChebNet(input_dim, hidden_dim, num_classes, num_hops, dropout)
    num_nodes = 16
    input_dim = 8
    hidden_dim = 32
    num_classes = 4
    num_hops = 3

    key = jax.random.PRNGKey(0)
    k_x, k_w1, k_b1, k_w2, k_b2 = jax.random.split(key, 5)

    # Node features
    x = jax.random.normal(k_x, (num_nodes, input_dim), jnp.float32)

    # Symmetric ring graph edge_index (2, 2*N)
    src = jnp.arange(num_nodes)
    dst = (src + 1) % num_nodes
    edge_index = jnp.stack(
        [jnp.concatenate([src, dst]), jnp.concatenate([dst, src])], axis=0
    )

    # Parameters (ChebConv: K weight mats per layer + one bias per layer)
    w1 = glorot(k_w1, (num_hops, input_dim, hidden_dim))
    b1 = 0.1 * jax.random.normal(k_b1, (1, hidden_dim), jnp.float32)
    w2 = glorot(k_w2, (num_hops, hidden_dim, num_classes))
    b2 = 0.1 * jax.random.normal(k_b2, (1, num_classes), jnp.float32)

    l_hat = build_scaled_laplacian(edge_index, num_nodes)

    # Pure-JAX f32 reference
    ref = chebnet_reference(l_hat, x, w1, b1, w2, b2, num_hops=num_hops)

    # f32 compute path: tight correctness check of tiling / padding / fusion.
    out_f32 = jax.block_until_ready(
        chebnet_forward(l_hat, x, w1, b1, w2, b2, num_hops=num_hops,
                        compute_dtype=jnp.float32))
    # bf16 compute path (production setting): structural sanity check.
    out_bf16 = jax.block_until_ready(
        chebnet_forward(l_hat, x, w1, b1, w2, b2, num_hops=num_hops,
                        compute_dtype=jnp.bfloat16))

    assert out_f32.shape == (num_nodes, num_classes)
    assert out_bf16.shape == (num_nodes, num_classes)
    # rows of log_softmax should exp-sum to 1
    assert jnp.allclose(jnp.exp(out_f32).sum(axis=1), 1.0, atol=1e-4)
    assert jnp.allclose(jnp.exp(out_bf16).sum(axis=1), 1.0, atol=1e-4)
    # match the reference
    assert float(jnp.max(jnp.abs(out_f32 - ref))) < 1e-3
    assert float(jnp.max(jnp.abs(out_bf16 - ref))) < 0.5  # bf16 operands, f32 accumulation

    print("KERNEL_OK")
</pallas_src>

<mosaic_0001>
module attributes {stable_mosaic.version = 11 : i64} {
  func.func @cheb_prop_kernel(%arg0: i32, %arg1: i32, %arg2: memref<128x128xf32, #tpu.memory_space<vmem>>, %arg3: memref<128x128xf32, #tpu.memory_space<vmem>>, %arg4: memref<128x128xf32, #tpu.memory_space<vmem>>, %arg5: memref<128x128xf32, #tpu.memory_space<vmem>>) attributes {dimension_semantics = [#tpu.dimension_semantics<parallel>, #tpu.dimension_semantics<arbitrary>], iteration_bounds = array<i64: 1, 1>, scalar_prefetch = 0 : i64, scratch_operands = 1 : i64, tpu.core_type = #tpu.core_type<tc>, window_params = [{transform_indices = @transform_0, window_bounds = array<i64: 128, 128>}, {transform_indices = @transform_1, window_bounds = array<i64: 128, 128>}, {transform_indices = @transform_2, window_bounds = array<i64: 128, 128>}]} {
    %c0_i32 = arith.constant 0 : i32
    %0 = arith.cmpi eq, %arg1, %c0_i32 : i32
    %1 = arith.extui %0 : i1 to i32
    %c0_i32_0 = arith.constant 0 : i32
    %2 = arith.cmpi ne, %1, %c0_i32_0 : i32
    scf.if %2 {
      %cst_10 = arith.constant 0.000000e+00 : f32
      %12 = vector.broadcast %cst_10 : f32 to vector<128x128xf32>
      %c0_11 = arith.constant 0 : index
      %c0_12 = arith.constant 0 : index
      %13 = vector.load %arg5[%c0_11, %c0_12] : memref<128x128xf32, #tpu.memory_space<vmem>>, vector<128x128xf32>
      tpu.vector_store %arg5[%c0_11, %c0_12], %12 {strides = array<i32>} : memref<128x128xf32, #tpu.memory_space<vmem>>, vector<128x128xf32>,
    } else {
    }
    %c0 = arith.constant 0 : index
    %c0_1 = arith.constant 0 : index
    %3 = vector.load %arg5[%c0, %c0_1] : memref<128x128xf32, #tpu.memory_space<vmem>>, vector<128x128xf32>
    %c0_2 = arith.constant 0 : index
    %c0_3 = arith.constant 0 : index
    %4 = vector.load %arg2[%c0_2, %c0_3] : memref<128x128xf32, #tpu.memory_space<vmem>>, vector<128x128xf32>
    %c0_4 = arith.constant 0 : index
    %c0_5 = arith.constant 0 : index
    %5 = vector.load %arg3[%c0_4, %c0_5] : memref<128x128xf32, #tpu.memory_space<vmem>>, vector<128x128xf32>
    %cst = arith.constant dense<0.000000e+00> : vector<128x128xf32>
    %6 = tpu.matmul %4, %5, %cst {dimension_numbers = #tpu.dot_dimension_numbers<[1], [0], [0], [1], [0, 0, 1, 1], [], []>} : vector<128x128xf32>, vector<128x128xf32>, vector<128x128xf32> -> vector<128x128xf32>
    %7 = arith.addf %3, %6 : vector<128x128xf32>
    %c0_6 = arith.constant 0 : index
    %c0_7 = arith.constant 0 : index
    %8 = vector.load %arg5[%c0_6, %c0_7] : memref<128x128xf32, #tpu.memory_space<vmem>>, vector<128x128xf32>
    tpu.vector_store %arg5[%c0_6, %c0_7], %7 {strides = array<i32>} : memref<128x128xf32, #tpu.memory_space<vmem>>, vector<128x128xf32>,
    %c0_i32_8 = arith.constant 0 : i32
    %9 = arith.cmpi eq, %arg1, %c0_i32_8 : i32
    %10 = arith.extui %9 : i1 to i32
    %c0_i32_9 = arith.constant 0 : i32
    %11 = arith.cmpi ne, %10, %c0_i32_9 : i32
    scf.if %11 {
      %c0_10 = arith.constant 0 : index
      %c0_11 = arith.constant 0 : index
      %12 = vector.load %arg5[%c0_10, %c0_11] : memref<128x128xf32, #tpu.memory_space<vmem>>, vector<128x128xf32>
      %c0_12 = arith.constant 0 : index
      %c0_13 = arith.constant 0 : index
      %13 = vector.load %arg4[%c0_12, %c0_13] : memref<128x128xf32, #tpu.memory_space<vmem>>, vector<128x128xf32>
      tpu.vector_store %arg4[%c0_12, %c0_13], %12 {strides = array<i32>} : memref<128x128xf32, #tpu.memory_space<vmem>>, vector<128x128xf32>,
    } else {
    }
    return
  }
  func.func @transform_0(%arg0: i32, %arg1: i32) -> (i32, i32) {
    %c0_i32 = arith.constant 0 : i32
    return %arg0, %arg1 : i32, i32
  }
  func.func @transform_1(%arg0: i32, %arg1: i32) -> (i32, i32) {
    %c0_i32 = arith.constant 0 : i32
    %c0_i32_0 = arith.constant 0 : i32
    return %arg1, %c0_i32 : i32, i32
  }
  func.func @transform_2(%arg0: i32, %arg1: i32) -> (i32, i32) {
    %c0_i32 = arith.constant 0 : i32
    %c0_i32_0 = arith.constant 0 : i32
    return %arg0, %c0_i32 : i32, i32
  }
}

</mosaic_0001>

<llo_original>
// kernel: tpu_custom_call.1
$region0: #{tpu_custom_call.1}
  #allocation0 [shape = 'u32[]', space=smem, size = 0x4, offset = 0x4, fixed_abs, tag = 'smem constant byte address 0x4 - core index']
  #allocation1 [shape = 'u32[144,128]{1,0:T(1,128)}', space=vmem, size = 0x12000, scoped, tag = 'internal scratch']
  #allocation2 [shape = 'f32[128,128]{1,0:T(8,128)}', space=vmem, size = 0x10000, scoped, tag = 'scratch operand']
  %s0 = inlined_call_operand.hbm [shape: f32[128,128], index: 0, kind: input, shape index: {}]
  %s1 = inlined_call_operand.hbm [shape: f32[128,128], index: 1, kind: input, shape index: {}]
  %s2 = inlined_call_operand.hbm [shape: f32[128,128], index: 2, kind: output, shape index: {}]
  %s3 = sld [smem:[#allocation0]]
  $region34: #{tpu_custom_call.1} parent=0
    _
  %s5 = ssub.s32 1, %s3
  %s6 = scalar_select 0, %s5, %s3
  $region1: #{tpu_custom_call.1} parent=0
    #allocation3 [shape = 'u8[65536]{0}', space=vmem, size = 0x10000, scoped, tag = 'input window, operand 0, single buffered']
    #allocation4 [shape = 's32[1]{0}', space=sflag, size = 0x4, scoped, tag = 'scoped memory for tpu_custom_call.1']
    #allocation5 [shape = 's32[1]{0}', space=sflag, size = 0x4, scoped, tag = 'scoped memory for tpu_custom_call.1']
    #allocation6 [shape = 'u8[65536]{0}', space=vmem, size = 0x10000, scoped, tag = 'input window, operand 1, single buffered']
    #allocation7 [shape = 's32[1]{0}', space=sflag, size = 0x4, scoped, tag = 'scoped memory for tpu_custom_call.1']
    #allocation8 [shape = 'u8[65536]{0}', space=vmem, size = 0x10000, scoped, tag = 'output window, operand 0, single buffered']
    %7 = vsyncpa [#allocation4], 0
    %8 = vsyncpa [#allocation7], 0
    %9 = vsyncpa [#allocation5], 0
    // Predicated region
    $region2: #{tpu_custom_call.1} parent=1 // pred_check
      _
    $region3: #{tpu_custom_call.1} parent=1 // pred_check_branch
      %11 = sbr.rel (0) target = $region5
    $region4: #{tpu_custom_call.1} parent=1 // pred_region
      %s13 = ssub.s32 2048, 2048
      %14 = vsyncadd [#allocation4], %s13
      %s15 = sshll.u32 [#allocation3], 4
      %s16 = int_to_ptr.vmem [resolvable:$true] %s15
      %21 = dma.hbm_to_vmem [thread:$0]  %s0, 2048, %s16, [#allocation4], 128, 128, 8
    $region5: #{tpu_custom_call.1} parent=1 // pred_fallthru
      _
    // Predicated region
    $region6: #{tpu_custom_call.1} parent=1 // pred_check
      _
    $region7: #{tpu_custom_call.1} parent=1 // pred_check_branch
      %23 = sbr.rel (0) target = $region9
    $region8: #{tpu_custom_call.1} parent=1 // pred_region
      %s25 = ssub.s32 2048, 2048
      %26 = vsyncadd [#allocation7], %s25
      %s27 = sshll.u32 [#allocation6], 4
      %s28 = int_to_ptr.vmem [resolvable:$true] %s27
      %33 = dma.hbm_to_vmem [thread:$0]  %s1, 2048, %s28, [#allocation7], 128, 128, 8
    $region9: #{tpu_custom_call.1} parent=1 // pred_fallthru
      _
    // Predicated region
    $region10: #{tpu_custom_call.1} parent=1 // pred_check
      _
    $region11: #{tpu_custom_call.1} parent=1 // pred_check_branch
      %35 = sbr.rel (0) target = $region13
    $region12: #{tpu_custom_call.1} parent=1 // pred_region
      %36 = dma.done [#allocation4], 2048
    $region13: #{tpu_custom_call.1} parent=1 // pred_fallthru
      _
    // Predicated region
    $region14: #{tpu_custom_call.1} parent=1 // pred_check
      _
    $region15: #{tpu_custom_call.1} parent=1 // pred_check_branch
      %38 = sbr.rel (0) target = $region17
    $region16: #{tpu_custom_call.1} parent=1 // pred_region
      %39 = dma.done [#allocation7], 2048
    $region17: #{tpu_custom_call.1} parent=1 // pred_fallthru
      _
    %p40 = scmp.eq.s32.totalorder 0, 0
    // Predicated region
    $region18: #{tpu_custom_call.1} parent=1 // pred_check
      %p41 = pneg %p40
    $region19: #{tpu_custom_call.1} parent=1 // pred_check_branch
      %43 = sbr.rel (%p41) target = $region21
    $region20: #{tpu_custom_call.1} parent=1 // pred_region
      %44 = vst [vmem:[#allocation2] sm:$0xff] 0.0
      %45 = vst [vmem:[#allocation2 + $0x8] sm:$0xff] 0.0
      %46 = vst [vmem:[#allocation2 + $0x10] sm:$0xff] 0.0
      %47 = vst [vmem:[#allocation2 + $0x18] sm:$0xff] 0.0
      %48 = vst [vmem:[#allocation2 + $0x20] sm:$0xff] 0.0
      %49 = vst [vmem:[#allocation2 + $0x28] sm:$0xff] 0.0
      %50 = vst [vmem:[#allocation2 + $0x30] sm:$0xff] 0.0
      %51 = vst [vmem:[#allocation2 + $0x38] sm:$0xff] 0.0
      %52 = vst [vmem:[#allocation2 + $0x40] sm:$0xff] 0.0
      %53 = vst [vmem:[#allocation2 + $0x48] sm:$0xff] 0.0
      %54 = vst [vmem:[#allocation2 + $0x50] sm:$0xff] 0.0
      %55 = vst [vmem:[#allocation2 + $0x58] sm:$0xff] 0.0
      %56 = vst [vmem:[#allocation2 + $0x60] sm:$0xff] 0.0
      %57 = vst [vmem:[#allocation2 + $0x68] sm:$0xff] 0.0
      %58 = vst [vmem:[#allocation2 + $0x70] sm:$0xff] 0.0
      %59 = vst [vmem:[#allocation2 + $0x78] sm:$0xff] 0.0
    $region21: #{tpu_custom_call.1} parent=1 // pred_fallthru
      _
    %v60 = vld [vmem:[#allocation2] sm:$0xff]
    %v61 = vld [vmem:[#allocation2 + $0x8] sm:$0xff]
    %v62 = vld [vmem:[#allocation2 + $0x10] sm:$0xff]
    %v63 = vld [vmem:[#allocation2 + $0x18] sm:$0xff]
    %v64 = vld [vmem:[#allocation2 + $0x20] sm:$0xff]
    %v65 = vld [vmem:[#allocation2 + $0x28] sm:$0xff]
    %v66 = vld [vmem:[#allocation2 + $0x30] sm:$0xff]
    %v67 = vld [vmem:[#allocation2 + $0x38] sm:$0xff]
    %v68 = vld [vmem:[#allocation2 + $0x40] sm:$0xff]
    %v69 = vld [vmem:[#allocation2 + $0x48] sm:$0xff]
    %v70 = vld [vmem:[#allocation2 + $0x50] sm:$0xff]
    %v71 = vld [vmem:[#allocation2 + $0x58] sm:$0xff]
    %v72 = vld [vmem:[#allocation2 + $0x60] sm:$0xff]
    %v73 = vld [vmem:[#allocation2 + $0x68] sm:$0xff]
    %v74 = vld [vmem:[#allocation2 + $0x70] sm:$0xff]
    %v75 = vld [vmem:[#allocation2 + $0x78] sm:$0xff]
    %v76 = vld [vmem:[#allocation3] sm:$0xff]
    %v77 = vld [vmem:[#allocation3 + $0x8] sm:$0xff]
    %v78 = vld [vmem:[#allocation3 + $0x10] sm:$0xff]
    %v79 = vld [vmem:[#allocation3 + $0x18] sm:$0xff]
    %v80 = vld [vmem:[#allocation3 + $0x20] sm:$0xff]
    %v81 = vld [vmem:[#allocation3 + $0x28] sm:$0xff]
    %v82 = vld [vmem:[#allocation3 + $0x30] sm:$0xff]
    %v83 = vld [vmem:[#allocation3 + $0x38] sm:$0xff]
    %v84 = vld [vmem:[#allocation3 + $0x40] sm:$0xff]
    %v85 = vld [vmem:[#allocation3 + $0x48] sm:$0xff]
    %v86 = vld [vmem:[#allocation3 + $0x50] sm:$0xff]
    %v87 = vld [vmem:[#allocation3 + $0x58] sm:$0xff]
    %v88 = vld [vmem:[#allocation3 + $0x60] sm:$0xff]
    %v89 = vld [vmem:[#allocation3 + $0x68] sm:$0xff]
    %v90 = vld [vmem:[#allocation3 + $0x70] sm:$0xff]
    %v91 = vld [vmem:[#allocation3 + $0x78] sm:$0xff]
    %v92 = vld [vmem:[#allocation6] sm:$0xff]
    %v93 = vld [vmem:[#allocation6 + $0x8] sm:$0xff]
    %v94 = vld [vmem:[#allocation6 + $0x10] sm:$0xff]
    %v95 = vld [vmem:[#allocation6 + $0x18] sm:$0xff]
    %v96 = vld [vmem:[#allocation6 + $0x20] sm:$0xff]
    %v97 = vld [vmem:[#allocation6 + $0x28] sm:$0xff]
    %v98 = vld [vmem:[#allocation6 + $0x30] sm:$0xff]
    %v99 = vld [vmem:[#allocation6 + $0x38] sm:$0xff]
    %v100 = vld [vmem:[#allocation6 + $0x40] sm:$0xff]
    %v101 = vld [vmem:[#allocation6 + $0x48] sm:$0xff]
    %v102 = vld [vmem:[#allocation6 + $0x50] sm:$0xff]
    %v103 = vld [vmem:[#allocation6 + $0x58] sm:$0xff]
    %v104 = vld [vmem:[#allocation6 + $0x60] sm:$0xff]
    %v105 = vld [vmem:[#allocation6 + $0x68] sm:$0xff]
    %v106 = vld [vmem:[#allocation6 + $0x70] sm:$0xff]
    %v107 = vld [vmem:[#allocation6 + $0x78] sm:$0xff]
    %108 = vmatprep.subr.mxu0 0.0
    %109 = vmatpush1.msra.mxu0 %v107
    %110 = vmatprep.subr.mxu0 0.0
    %111 = vmatpush1.msra.mxu0 %v106
    %112 = vmatprep.subr.mxu0 0.0
    %113 = vmatpush1.msra.mxu0 %v105
    %114 = vmatprep.subr.mxu0 0.0
    %115 = vmatpush1.msra.mxu0 %v104
    %116 = vmatprep.subr.mxu0 0.0
    %117 = vmatpush1.msra.mxu0 %v103
    %118 = vmatprep.subr.mxu0 0.0
    %119 = vmatpush1.msra.mxu0 %v102
    %120 = vmatprep.subr.mxu0 0.0
    %121 = vmatpush1.msra.mxu0 %v101
    %122 = vmatprep.subr.mxu0 0.0
    %123 = vmatpush1.msra.mxu0 %v100
    %124 = vmatprep.subr.mxu0 0.0
    %125 = vmatpush1.msra.mxu0 %v99
    %126 = vmatprep.subr.mxu0 0.0
    %127 = vmatpush1.msra.mxu0 %v98
    %128 = vmatprep.subr.mxu0 0.0
    %129 = vmatpush1.msra.mxu0 %v97
    %130 = vmatprep.subr.mxu0 0.0
    %131 = vmatpush1.msra.mxu0 %v96
    %132 = vmatprep.subr.mxu0 0.0
    %133 = vmatpush1.msra.mxu0 %v95
    %134 = vmatprep.subr.mxu0 0.0
    %135 = vmatpush1.msra.mxu0 %v94
    %136 = vmatprep.subr.mxu0 0.0
    %137 = vmatpush1.msra.mxu0 %v93
    %138 = vmatprep.subr.mxu0 0.0
    %139 = vmatpush1.msra.mxu0 %v92
    %140 = vmatprep.subr.mxu0 0.0
    %141 = vmatpush2.msra.mxu0 0.0
    %142 = vmatprep.subr.mxu0 0.0
    %143 = vmatpush2.msra.mxu0 0.0
    %144 = vmatprep.subr.mxu0 0.0
    %145 = vmatpush2.msra.mxu0 0.0
    %146 = vmatprep.subr.mxu0 0.0
    %147 = vmatpush2.msra.mxu0 0.0
    %148 = vmatprep.subr.mxu0 0.0
    %149 = vmatpush2.msra.mxu0 0.0
    %150 = vmatprep.subr.mxu0 0.0
    %151 = vmatpush2.msra.mxu0 0.0
    %152 = vmatprep.subr.mxu0 0.0
    %153 = vmatpush2.msra.mxu0 0.0
    %154 = vmatprep.subr.mxu0 0.0
    %155 = vmatpush2.msra.mxu0 0.0
    %156 = vmatprep.subr.mxu0 0.0
    %157 = vmatpush2.msra.mxu0 0.0
    %158 = vmatprep.subr.mxu0 0.0
    %159 = vmatpush2.msra.mxu0 0.0
    %160 = vmatprep.subr.mxu0 0.0
    %161 = vmatpush2.msra.mxu0 0.0
    %162 = vmatprep.subr.mxu0 0.0
    %163 = vmatpush2.msra.mxu0 0.0
    %164 = vmatprep.subr.mxu0 0.0
    %165 = vmatpush2.msra.mxu0 0.0
    %166 = vmatprep.subr.mxu0 0.0
    %167 = vmatpush2.msra.mxu0 0.0
    %168 = vmatprep.subr.mxu0 0.0
    %169 = vmatpush2.msra.mxu0 0.0
    %170 = vmatprep.subr.mxu0 0.0
    %171 = vmatpush2.msra.mxu0 0.0
    %172 = vmatprep.mubr.f32.mxu0 0.0
    %173 = vmatmul.mubr.f32.gmra.mxu0 %v76
    %v174 = vpop.f32.mrf.mxu0
    %v175 = vadd.f32 0.0, %v174
    %v176 = vpop.f32.mrf.mxu0
    %177 = vmatprep.mubr.f32.mxu0 0.0
    %178 = vmatmul.mubr.f32.gmra.mxu0 %v77
    %v179 = vpop.f32.mrf.mxu0
    %v180 = vadd.f32 0.0, %v179
    %v181 = vpop.f32.mrf.mxu0
    %182 = vmatprep.mubr.f32.mxu0 0.0
    %183 = vmatmul.mubr.f32.gmra.mxu0 %v78
    %v184 = vpop.f32.mrf.mxu0
    %v185 = vadd.f32 0.0, %v184
    %v186 = vpop.f32.mrf.mxu0
    %187 = vmatprep.mubr.f32.mxu0 0.0
    %188 = vmatmul.mubr.f32.gmra.mxu0 %v79
    %v189 = vpop.f32.mrf.mxu0
    %v190 = vadd.f32 0.0, %v189
    %v191 = vpop.f32.mrf.mxu0
    %192 = vmatprep.mubr.f32.mxu0 0.0
    %193 = vmatmul.mubr.f32.gmra.mxu0 %v80
    %v194 = vpop.f32.mrf.mxu0
    %v195 = vadd.f32 0.0, %v194
    %v196 = vpop.f32.mrf.mxu0
    %197 = vmatprep.mubr.f32.mxu0 0.0
    %198 = vmatmul.mubr.f32.gmra.mxu0 %v81
    %v199 = vpop.f32.mrf.mxu0
    %v200 = vadd.f32 0.0, %v199
    %v201 = vpop.f32.mrf.mxu0
    %202 = vmatprep.mubr.f32.mxu0 0.0
    %203 = vmatmul.mubr.f32.gmra.mxu0 %v82
    %v204 = vpop.f32.mrf.mxu0
    %v205 = vadd.f32 0.0, %v204
    %v206 = vpop.f32.mrf.mxu0
    %207 = vmatprep.mubr.f32.mxu0 0.0
    %208 = vmatmul.mubr.f32.gmra.mxu0 %v83
    %v209 = vpop.f32.mrf.mxu0
    %v210 = vadd.f32 0.0, %v209
    %v211 = vpop.f32.mrf.mxu0
    %212 = vmatprep.mubr.f32.mxu0 0.0
    %213 = vmatmul.mubr.f32.gmra.mxu0 %v84
    %v214 = vpop.f32.mrf.mxu0
    %v215 = vadd.f32 0.0, %v214
    %v216 = vpop.f32.mrf.mxu0
    %217 = vmatprep.mubr.f32.mxu0 0.0
    %218 = vmatmul.mubr.f32.gmra.mxu0 %v85
    %v219 = vpop.f32.mrf.mxu0
    %v220 = vadd.f32 0.0, %v219
    %v221 = vpop.f32.mrf.mxu0
    %222 = vmatprep.mubr.f32.mxu0 0.0
    %223 = vmatmul.mubr.f32.gmra.mxu0 %v86
    %v224 = vpop.f32.mrf.mxu0
    %v225 = vadd.f32 0.0, %v224
    %v226 = vpop.f32.mrf.mxu0
    %227 = vmatprep.mubr.f32.mxu0 0.0
    %228 = vmatmul.mubr.f32.gmra.mxu0 %v87
    %v229 = vpop.f32.mrf.mxu0
    %v230 = vadd.f32 0.0, %v229
    %v231 = vpop.f32.mrf.mxu0
    %232 = vmatprep.mubr.f32.mxu0 0.0
    %233 = vmatmul.mubr.f32.gmra.mxu0 %v88
    %v234 = vpop.f32.mrf.mxu0
    %v235 = vadd.f32 0.0, %v234
    %v236 = vpop.f32.mrf.mxu0
    %237 = vmatprep.mubr.f32.mxu0 0.0
    %238 = vmatmul.mubr.f32.gmra.mxu0 %v89
    %v239 = vpop.f32.mrf.mxu0
    %v240 = vadd.f32 0.0, %v239
    %v241 = vpop.f32.mrf.mxu0
    %242 = vmatprep.mubr.f32.mxu0 0.0
    %243 = vmatmul.mubr.f32.gmra.mxu0 %v90
    %v244 = vpop.f32.mrf.mxu0
    %v245 = vadd.f32 0.0, %v244
    %v246 = vpop.f32.mrf.mxu0
    %247 = vmatprep.mubr.f32.mxu0 0.0
    %248 = vmatmul.mubr.f32.gmra.mxu0 %v91
    %v249 = vpop.f32.mrf.mxu0
    %v250 = vadd.f32 0.0, %v249
    %v251 = vpop.f32.mrf.mxu0
    %252 = vdwg.mxu0
    %v253 = vadd.f32 %v60, %v175
    %v254 = vadd.f32 %v61, %v180
    %v255 = vadd.f32 %v62, %v185
    %v256 = vadd.f32 %v63, %v190
    %v257 = vadd.f32 %v64, %v195
    %v258 = vadd.f32 %v65, %v200
    %v259 = vadd.f32 %v66, %v205
    %v260 = vadd.f32 %v67, %v210
    %v261 = vadd.f32 %v68, %v215
    %v262 = vadd.f32 %v69, %v220
    %v263 = vadd.f32 %v70, %v225
    %v264 = vadd.f32 %v71, %v230
    %v265 = vadd.f32 %v72, %v235
    %v266 = vadd.f32 %v73, %v240
    %v267 = vadd.f32 %v74, %v245
    %v268 = vadd.f32 %v75, %v250
    %269 = vst [vmem:[#allocation2] sm:$0xff] %v253
    %270 = vst [vmem:[#allocation2 + $0x8] sm:$0xff] %v254
    %271 = vst [vmem:[#allocation2 + $0x10] sm:$0xff] %v255
    %272 = vst [vmem:[#allocation2 + $0x18] sm:$0xff] %v256
    %273 = vst [vmem:[#allocation2 + $0x20] sm:$0xff] %v257
    %274 = vst [vmem:[#allocation2 + $0x28] sm:$0xff] %v258
    %275 = vst [vmem:[#allocation2 + $0x30] sm:$0xff] %v259
    %276 = vst [vmem:[#allocation2 + $0x38] sm:$0xff] %v260
    %277 = vst [vmem:[#allocation2 + $0x40] sm:$0xff] %v261
    %278 = vst [vmem:[#allocation2 + $0x48] sm:$0xff] %v262
    %279 = vst [vmem:[#allocation2 + $0x50] sm:$0xff] %v263
    %280 = vst [vmem:[#allocation2 + $0x58] sm:$0xff] %v264
    %281 = vst [vmem:[#allocation2 + $0x60] sm:$0xff] %v265
    %282 = vst [vmem:[#allocation2 + $0x68] sm:$0xff] %v266
    %283 = vst [vmem:[#allocation2 + $0x70] sm:$0xff] %v267
    %284 = vst [vmem:[#allocation2 + $0x78] sm:$0xff] %v268
    // Predicated region
    $region22: #{tpu_custom_call.1} parent=1 // pred_check
      %p285 = pneg %p40
    $region23: #{tpu_custom_call.1} parent=1 // pred_check_branch
      %287 = sbr.rel (%p285) target = $region25
    $region24: #{tpu_custom_call.1} parent=1 // pred_region
      %v288 = vld [vmem:[#allocation2] sm:$0xff]
      %v289 = vld [vmem:[#allocation2 + $0x8] sm:$0xff]
      %v290 = vld [vmem:[#allocation2 + $0x10] sm:$0xff]
      %v291 = vld [vmem:[#allocation2 + $0x18] sm:$0xff]
      %v292 = vld [vmem:[#allocation2 + $0x20] sm:$0xff]
      %v293 = vld [vmem:[#allocation2 + $0x28] sm:$0xff]
      %v294 = vld [vmem:[#allocation2 + $0x30] sm:$0xff]
      %v295 = vld [vmem:[#allocation2 + $0x38] sm:$0xff]
      %v296 = vld [vmem:[#allocation2 + $0x40] sm:$0xff]
      %v297 = vld [vmem:[#allocation2 + $0x48] sm:$0xff]
      %v298 = vld [vmem:[#allocation2 + $0x50] sm:$0xff]
      %v299 = vld [vmem:[#allocation2 + $0x58] sm:$0xff]
      %v300 = vld [vmem:[#allocation2 + $0x60] sm:$0xff]
      %v301 = vld [vmem:[#allocation2 + $0x68] sm:$0xff]
      %v302 = vld [vmem:[#allocation2 + $0x70] sm:$0xff]
      %v303 = vld [vmem:[#allocation2 + $0x78] sm:$0xff]
      %304 = vst [vmem:[#allocation8] sm:$0xff] %v288
      %305 = vst [vmem:[#allocation8 + $0x8] sm:$0xff] %v289
      %306 = vst [vmem:[#allocation8 + $0x10] sm:$0xff] %v290
      %307 = vst [vmem:[#allocation8 + $0x18] sm:$0xff] %v291
      %308 = vst [vmem:[#allocation8 + $0x20] sm:$0xff] %v292
      %309 = vst [vmem:[#allocation8 + $0x28] sm:$0xff] %v293
      %310 = vst [vmem:[#allocation8 + $0x30] sm:$0xff] %v294
      %311 = vst [vmem:[#allocation8 + $0x38] sm:$0xff] %v295
      %312 = vst [vmem:[#allocation8 + $0x40] sm:$0xff] %v296
      %313 = vst [vmem:[#allocation8 + $0x48] sm:$0xff] %v297
      %314 = vst [vmem:[#allocation8 + $0x50] sm:$0xff] %v298
      %315 = vst [vmem:[#allocation8 + $0x58] sm:$0xff] %v299
      %316 = vst [vmem:[#allocation8 + $0x60] sm:$0xff] %v300
      %317 = vst [vmem:[#allocation8 + $0x68] sm:$0xff] %v301
      %318 = vst [vmem:[#allocation8 + $0x70] sm:$0xff] %v302
      %319 = vst [vmem:[#allocation8 + $0x78] sm:$0xff] %v303
    $region25: #{tpu_custom_call.1} parent=1 // pred_fallthru
      _
    // Predicated region
    $region26: #{tpu_custom_call.1} parent=1 // pred_check
      _
    $region27: #{tpu_custom_call.1} parent=1 // pred_check_branch
      %321 = sbr.rel (0) target = $region29
    $region28: #{tpu_custom_call.1} parent=1 // pred_region
      %s323 = ssub.s32 2048, 2048
      %324 = vsyncadd [#allocation5], %s323
      %s325 = sshll.u32 [#allocation8], 4
      %s326 = int_to_ptr.vmem [resolvable:$true] %s325
      %331 = dma.vmem_to_hbm [thread:$0]  %s326, 2048, %s2, [#allocation5], 128, 128, 8
    $region29: #{tpu_custom_call.1} parent=1 // pred_fallthru
      _
    // Predicated region
    $region30: #{tpu_custom_call.1} parent=1 // pred_check
      _
    $region31: #{tpu_custom_call.1} parent=1 // pred_check_branch
      %333 = sbr.rel (0) target = $region33
    $region32: #{tpu_custom_call.1} parent=1 // pred_region
      %334 = dma.done [#allocation5], 2048
    $region33: #{tpu_custom_call.1} parent=1 // pred_fallthru
      _
    %335 = vsyncpa [#allocation4], 1
    %336 = vsyncpa [#allocation7], 1
    %337 = vsyncpa [#allocation5], 1

</llo_original>
